<compile_context>
chip_gen: v7x
topology: tpu7x:2x2x1
jax: 0.10.0
libtpu: 0.0.40
codegen_flags: <defaults>
</compile_context>

<pallas_src>
import jax
import jax.numpy as jnp
from jax.experimental import pallas as pl
from jax.experimental.pallas import tpu as pltpu


def _round_up(x, m):
    return (x + m - 1) // m * m


# ----------------------------- Pallas kernel ------------------------------ #
def _make_kernel(kernel_sizes, seq_len, filters):
    F = filters

    def kernel(x_ref, wconv_ref, bconv_ref, wfc_ref, bfc_ref, out_ref):
        tb, s, e = x_ref.shape
        # (TB, S, E) bf16 -> (TB*S, E); single fused MXU matmul over all taps
        # of all kernel sizes (stacked along N, padded to 128 lanes).
        x2d = x_ref[...].reshape(tb * s, e)
        y = jnp.dot(x2d, wconv_ref[...], preferred_element_type=jnp.float32)
        y = y.reshape(tb, s, -1)                       # (TB, S, NT_pad) f32

        logits = bfc_ref[...]                          # (1, L_pad) f32
        col = 0
        for idx, k in enumerate(kernel_sizes):
            t = seq_len - k + 1
            # Valid conv = shift-and-add of per-tap matmul outputs.
            acc = y[:, 0:t, col:col + F]
            for j in range(1, k):
                acc = acc + y[:, j:j + t, col + j * F: col + (j + 1) * F]
            col += k * F
            # Bias folded into the ReLU operand (no separate zero/acc init).
            acc = jnp.maximum(acc + bconv_ref[idx:idx + 1, :], 0.0)
            pooled = jnp.max(acc, axis=1)              # (TB, F) max over time
            # FC as per-segment dot on a static weight slice (no concat).
            logits = logits + jnp.dot(
                pooled,
                wfc_ref[idx * F:(idx + 1) * F, :],
                preferred_element_type=jnp.float32,
            )
        out_ref[...] = logits.astype(out_ref.dtype)

    return kernel


# ------------------------------- wrapper ----------------------------------- #
def cnn_classify_forward(x_emb, conv_ws, conv_bs, fc_w, fc_b, kernel_sizes,
                         *, block_b=128):
    """x_emb: (B, S, E) f32. conv_ws[i]: (k_i, E, F). fc_w: (n_k*F, L).

    Returns logits (B, L) in f32.
    """
    B, S, E = x_emb.shape
    F = conv_ws[0].shape[-1]
    L = fc_w.shape[-1]
    n_k = len(kernel_sizes)

    # Batch tile: multiple of 8 (sublane requirement on the output block).
    TB = max(8, _round_up(min(block_b, max(B, 1)), 8))
    B_pad = _round_up(B, TB)
    L_pad = _round_up(L, 128)                      # lane-dense output

    # bf16 storage / matmul dtype; zero-pad the batch (safe through ReLU/max).
    x_p = jnp.zeros((B_pad, S, E), jnp.bfloat16).at[:B].set(
        x_emb.astype(jnp.bfloat16))

    # Stack all conv taps along the MXU N dim: (E, sum_k k*F), pad N to 128.
    cols = [jnp.transpose(w, (1, 0, 2)).reshape(E, w.shape[0] * F)
            for w in conv_ws]
    w_all = jnp.concatenate(cols, axis=1)
    NT = w_all.shape[1]
    NT_pad = _round_up(NT, 128)
    w_all = jnp.pad(w_all, ((0, 0), (0, NT_pad - NT))).astype(jnp.bfloat16)

    b_all = jnp.stack([b.reshape(F) for b in conv_bs], axis=0).astype(
        jnp.float32)                                           # (n_k, F)

    fc_wp = jnp.pad(fc_w.astype(jnp.float32),
                    ((0, 0), (0, L_pad - L)))                  # (n_k*F, L_pad)
    fc_bp = jnp.pad(fc_b.reshape(1, L).astype(jnp.float32),
                    ((0, 0), (0, L_pad - L)))                  # (1, L_pad)

    kernel = _make_kernel(tuple(kernel_sizes), S, F)

    in_specs = [
        pl.BlockSpec((TB, S, E), lambda b: (b, 0, 0)),         # activations
        pl.BlockSpec((E, NT_pad), lambda b: (0, 0)),           # fused conv W
        pl.BlockSpec((n_k, F), lambda b: (0, 0)),              # conv biases
        pl.BlockSpec((n_k * F, L_pad), lambda b: (0, 0)),      # fc weight
        pl.BlockSpec((1, L_pad), lambda b: (0, 0)),            # fc bias
    ]
    out_spec = pl.BlockSpec((TB, L_pad), lambda b: (b, 0))

    fn = pl.pallas_call(
        kernel,
        out_shape=jax.ShapeDtypeStruct((B_pad, L_pad), jnp.float32),
        grid_spec=pltpu.PrefetchScalarGridSpec(
            num_scalar_prefetch=0,
            grid=(B_pad // TB,),
            in_specs=in_specs,
            out_specs=out_spec,
        ),
        compiler_params=pltpu.CompilerParams(
            dimension_semantics=("parallel",),
        ),
    )
    out = fn(x_p, w_all, b_all, fc_wp, fc_bp)
    return out[:B, :L]


# -------------------------- pure-JAX reference ----------------------------- #
def reference_forward(x_emb, conv_ws, conv_bs, fc_w, fc_b, kernel_sizes):
    B, S, E = x_emb.shape
    pooled = []
    for idx, k in enumerate(kernel_sizes):
        t = S - k + 1
        acc = jnp.zeros((B, t, conv_ws[idx].shape[-1]), jnp.float32)
        for j in range(k):
            acc = acc + jnp.einsum("bte,ef->btf",
                                   x_emb[:, j:j + t, :], conv_ws[idx][j])
        acc = jnp.maximum(acc + conv_bs[idx], 0.0)
        pooled.append(jnp.max(acc, axis=1))
    h = jnp.concatenate(pooled, axis=1)
    return h @ fc_w + fc_b


# --------------------------------- main ------------------------------------ #
if __name__ == "__main__":
    VOCAB = 50
    PAD_IDX = 0
    EMB_DIM = 32
    FILTERS = 8
    KERNEL_SIZES = (3, 4, 5)
    LABELS = 4
    B, S = 16, 16          # small demo; TB=8 -> grid of 2 steps (both v7x TCs)

    key = jax.random.PRNGKey(0)
    k_emb, k_x, k_fc, *k_convs = jax.random.split(key, 3 + len(KERNEL_SIZES))

    # Embedding table (xavier-ish init), padding row zeroed.
    emb_table = jax.random.normal(k_emb, (VOCAB, EMB_DIM), jnp.float32) * 0.1
    emb_table = emb_table.at[PAD_IDX].set(0.0)

    # Conv weights: PyTorch (F, 1, k, E) -> kernel layout (k, E, F).
    conv_ws, conv_bs = [], []
    for i, k in enumerate(KERNEL_SIZES):
        kw, kb = jax.random.split(k_convs[i])
        w = jax.random.normal(kw, (k, EMB_DIM, FILTERS), jnp.float32) * 0.1
        b = jax.random.normal(kb, (1, FILTERS), jnp.float32) * 0.1
        conv_ws.append(w)
        conv_bs.append(b)

    # FC: PyTorch (L, n_k*F) weight -> stored transposed (n_k*F, L).
    kfw, kfb = jax.random.split(k_fc)
    fc_w = jax.random.normal(
        kfw, (len(KERNEL_SIZES) * FILTERS, LABELS), jnp.float32) * 0.1
    fc_b = jax.random.normal(kfb, (1, LABELS), jnp.float32) * 0.1

    # Token ids and embedding lookup (glue, plain JAX gather).
    x_ids = jax.random.randint(k_x, (B, S), 0, VOCAB, dtype=jnp.int32)
    x_emb = emb_table[x_ids]                      # (B, S, E)

    logits = cnn_classify_forward(x_emb, conv_ws, conv_bs, fc_w, fc_b,
                                  KERNEL_SIZES, block_b=8)
    logits = jax.block_until_ready(logits)

    # Reference on the same bf16-rounded activations/conv weights (the kernel
    # uses bf16 storage with f32 accumulation).
    x_ref_in = x_emb.astype(jnp.bfloat16).astype(jnp.float32)
    conv_ws_ref = [w.astype(jnp.bfloat16).astype(jnp.float32) for w in conv_ws]
    ref = reference_forward(x_ref_in, conv_ws_ref, conv_bs, fc_w, fc_b,
                            KERNEL_SIZES)

    assert logits.shape == (B, LABELS)
    assert jnp.allclose(logits, ref, rtol=1e-4, atol=1e-4), (logits, ref)

    print("KERNEL_OK")
</pallas_src>

<mosaic_0001>
module attributes {stable_mosaic.version = 11 : i64} {
  func.func @kernel(%arg0: i32, %arg1: memref<8x16x32xbf16, #tpu.memory_space<vmem>>, %arg2: memref<32x128xbf16, #tpu.memory_space<vmem>>, %arg3: memref<3x8xf32, #tpu.memory_space<vmem>>, %arg4: memref<24x128xf32, #tpu.memory_space<vmem>>, %arg5: memref<1x128xf32, #tpu.memory_space<vmem>>, %arg6: memref<8x128xf32, #tpu.memory_space<vmem>>) attributes {dimension_semantics = [#tpu.dimension_semantics<parallel>], iteration_bounds = array<i64: 2>, scalar_prefetch = 0 : i64, scratch_operands = 0 : i64, tpu.core_type = #tpu.core_type<tc>, window_params = [{transform_indices = @transform_0, window_bounds = array<i64: 8, 16, 32>}, {pipeline_mode = #tpu.pipeline_mode<synchronous>, transform_indices = @transform_1, window_bounds = array<i64: 32, 128>}, {pipeline_mode = #tpu.pipeline_mode<synchronous>, transform_indices = @transform_2, window_bounds = array<i64: 3, 8>}, {pipeline_mode = #tpu.pipeline_mode<synchronous>, transform_indices = @transform_3, window_bounds = array<i64: 24, 128>}, {pipeline_mode = #tpu.pipeline_mode<synchronous>, transform_indices = @transform_4, window_bounds = array<i64: 1, 128>}, {transform_indices = @transform_5, window_bounds = array<i64: 8, 128>}]} {
    %c0 = arith.constant 0 : index
    %c0_0 = arith.constant 0 : index
    %c0_1 = arith.constant 0 : index
    %0 = vector.load %arg1[%c0, %c0_0, %c0_1] : memref<8x16x32xbf16, #tpu.memory_space<vmem>>, vector<8x16x32xbf16>
    %1 = vector.shape_cast %0 : vector<8x16x32xbf16> to vector<128x32xbf16>
    %c0_2 = arith.constant 0 : index
    %c0_3 = arith.constant 0 : index
    %2 = vector.load %arg2[%c0_2, %c0_3] : memref<32x128xbf16, #tpu.memory_space<vmem>>, vector<32x128xbf16>
    %cst = arith.constant dense<0.000000e+00> : vector<128x128xf32>
    %3 = tpu.matmul %1, %2, %cst {dimension_numbers = #tpu.dot_dimension_numbers<[1], [0], [0], [1], [0, 0, 1, 1], [], []>} : vector<128x32xbf16>, vector<32x128xbf16>, vector<128x128xf32> -> vector<128x128xf32>
    %4 = vector.shape_cast %3 : vector<128x128xf32> to vector<8x16x128xf32>
    %c0_4 = arith.constant 0 : index
    %c0_5 = arith.constant 0 : index
    %5 = vector.load %arg5[%c0_4, %c0_5] : memref<1x128xf32, #tpu.memory_space<vmem>>, vector<1x128xf32>
    %6 = vector.extract_strided_slice %4 {offsets = [0, 0, 0], sizes = [8, 14, 8], strides = [1, 1, 1]} : vector<8x16x128xf32> to vector<8x14x8xf32>
    %7 = vector.extract_strided_slice %4 {offsets = [0, 1, 8], sizes = [8, 14, 8], strides = [1, 1, 1]} : vector<8x16x128xf32> to vector<8x14x8xf32>
    %8 = arith.addf %6, %7 : vector<8x14x8xf32>
    %9 = vector.extract_strided_slice %4 {offsets = [0, 2, 16], sizes = [8, 14, 8], strides = [1, 1, 1]} : vector<8x16x128xf32> to vector<8x14x8xf32>
    %10 = arith.addf %8, %9 : vector<8x14x8xf32>
    %c0_6 = arith.constant 0 : index
    %c0_7 = arith.constant 0 : index
    %11 = vector.load %arg3[%c0_6, %c0_7] : memref<3x8xf32, #tpu.memory_space<vmem>>, vector<1x8xf32>
    %12 = vector.shape_cast %11 : vector<1x8xf32> to vector<1x1x8xf32>
    %13 = vector.broadcast %12 : vector<1x1x8xf32> to vector<8x14x8xf32>
    %14 = arith.addf %10, %13 : vector<8x14x8xf32>
    %cst_8 = arith.constant 0.000000e+00 : f32
    %15 = vector.broadcast %cst_8 : f32 to vector<8x14x8xf32>
    %16 = arith.maximumf %14, %15 : vector<8x14x8xf32>
    %cst_9 = arith.constant dense<0xFF800000> : vector<8x8xf32>
    %17 = vector.multi_reduction <maximumf>, %16, %cst_9 [1] : vector<8x14x8xf32> to vector<8x8xf32>
    %c0_10 = arith.constant 0 : index
    %c0_11 = arith.constant 0 : index
    %18 = vector.load %arg4[%c0_10, %c0_11] : memref<24x128xf32, #tpu.memory_space<vmem>>, vector<8x128xf32>
    %cst_12 = arith.constant dense<0.000000e+00> : vector<8x128xf32>
    %19 = tpu.matmul %17, %18, %cst_12 {dimension_numbers = #tpu.dot_dimension_numbers<[1], [0], [0], [1], [0, 0, 1, 1], [], []>} : vector<8x8xf32>, vector<8x128xf32>, vector<8x128xf32> -> vector<8x128xf32>
    %20 = vector.broadcast %5 : vector<1x128xf32> to vector<8x128xf32>
    %21 = arith.addf %20, %19 : vector<8x128xf32>
    %22 = vector.extract_strided_slice %4 {offsets = [0, 0, 24], sizes = [8, 13, 8], strides = [1, 1, 1]} : vector<8x16x128xf32> to vector<8x13x8xf32>
    %23 = vector.extract_strided_slice %4 {offsets = [0, 1, 32], sizes = [8, 13, 8], strides = [1, 1, 1]} : vector<8x16x128xf32> to vector<8x13x8xf32>
    %24 = arith.addf %22, %23 : vector<8x13x8xf32>
    %25 = vector.extract_strided_slice %4 {offsets = [0, 2, 40], sizes = [8, 13, 8], strides = [1, 1, 1]} : vector<8x16x128xf32> to vector<8x13x8xf32>
    %26 = arith.addf %24, %25 : vector<8x13x8xf32>
    %27 = vector.extract_strided_slice %4 {offsets = [0, 3, 48], sizes = [8, 13, 8], strides = [1, 1, 1]} : vector<8x16x128xf32> to vector<8x13x8xf32>
    %28 = arith.addf %26, %27 : vector<8x13x8xf32>
    %c1 = arith.constant 1 : index
    %c0_13 = arith.constant 0 : index
    %29 = vector.load %arg3[%c1, %c0_13] : memref<3x8xf32, #tpu.memory_space<vmem>>, vector<1x8xf32>
    %30 = vector.shape_cast %29 : vector<1x8xf32> to vector<1x1x8xf32>
    %31 = vector.broadcast %30 : vector<1x1x8xf32> to vector<8x13x8xf32>
    %32 = arith.addf %28, %31 : vector<8x13x8xf32>
    %cst_14 = arith.constant 0.000000e+00 : f32
    %33 = vector.broadcast %cst_14 : f32 to vector<8x13x8xf32>
    %34 = arith.maximumf %32, %33 : vector<8x13x8xf32>
    %cst_15 = arith.constant dense<0xFF800000> : vector<8x8xf32>
    %35 = vector.multi_reduction <maximumf>, %34, %cst_15 [1] : vector<8x13x8xf32> to vector<8x8xf32>
    %c8 = arith.constant 8 : index
    %c0_16 = arith.constant 0 : index
    %36 = vector.load %arg4[%c8, %c0_16] : memref<24x128xf32, #tpu.memory_space<vmem>>, vector<8x128xf32>
    %cst_17 = arith.constant dense<0.000000e+00> : vector<8x128xf32>
    %37 = tpu.matmul %35, %36, %cst_17 {dimension_numbers = #tpu.dot_dimension_numbers<[1], [0], [0], [1], [0, 0, 1, 1], [], []>} : vector<8x8xf32>, vector<8x128xf32>, vector<8x128xf32> -> vector<8x128xf32>
    %38 = arith.addf %21, %37 : vector<8x128xf32>
    %39 = vector.extract_strided_slice %4 {offsets = [0, 0, 56], sizes = [8, 12, 8], strides = [1, 1, 1]} : vector<8x16x128xf32> to vector<8x12x8xf32>
    %40 = vector.extract_strided_slice %4 {offsets = [0, 1, 64], sizes = [8, 12, 8], strides = [1, 1, 1]} : vector<8x16x128xf32> to vector<8x12x8xf32>
    %41 = arith.addf %39, %40 : vector<8x12x8xf32>
    %42 = vector.extract_strided_slice %4 {offsets = [0, 2, 72], sizes = [8, 12, 8], strides = [1, 1, 1]} : vector<8x16x128xf32> to vector<8x12x8xf32>
    %43 = arith.addf %41, %42 : vector<8x12x8xf32>
    %44 = vector.extract_strided_slice %4 {offsets = [0, 3, 80], sizes = [8, 12, 8], strides = [1, 1, 1]} : vector<8x16x128xf32> to vector<8x12x8xf32>
    %45 = arith.addf %43, %44 : vector<8x12x8xf32>
    %46 = vector.extract_strided_slice %4 {offsets = [0, 4, 88], sizes = [8, 12, 8], strides = [1, 1, 1]} : vector<8x16x128xf32> to vector<8x12x8xf32>
    %47 = arith.addf %45, %46 : vector<8x12x8xf32>
    %c2 = arith.constant 2 : index
    %c0_18 = arith.constant 0 : index
    %48 = vector.load %arg3[%c2, %c0_18] : memref<3x8xf32, #tpu.memory_space<vmem>>, vector<1x8xf32>
    %49 = vector.shape_cast %48 : vector<1x8xf32> to vector<1x1x8xf32>
    %50 = vector.broadcast %49 : vector<1x1x8xf32> to vector<8x12x8xf32>
    %51 = arith.addf %47, %50 : vector<8x12x8xf32>
    %cst_19 = arith.constant 0.000000e+00 : f32
    %52 = vector.broadcast %cst_19 : f32 to vector<8x12x8xf32>
    %53 = arith.maximumf %51, %52 : vector<8x12x8xf32>
    %cst_20 = arith.constant dense<0xFF800000> : vector<8x8xf32>
    %54 = vector.multi_reduction <maximumf>, %53, %cst_20 [1] : vector<8x12x8xf32> to vector<8x8xf32>
    %c16 = arith.constant 16 : index
    %c0_21 = arith.constant 0 : index
    %55 = vector.load %arg4[%c16, %c0_21] : memref<24x128xf32, #tpu.memory_space<vmem>>, vector<8x128xf32>
    %cst_22 = arith.constant dense<0.000000e+00> : vector<8x128xf32>
    %56 = tpu.matmul %54, %55, %cst_22 {dimension_numbers = #tpu.dot_dimension_numbers<[1], [0], [0], [1], [0, 0, 1, 1], [], []>} : vector<8x8xf32>, vector<8x128xf32>, vector<8x128xf32> -> vector<8x128xf32>
    %57 = arith.addf %38, %56 : vector<8x128xf32>
    %c0_23 = arith.constant 0 : index
    %c0_24 = arith.constant 0 : index
    %58 = vector.load %arg6[%c0_23, %c0_24] : memref<8x128xf32, #tpu.memory_space<vmem>>, vector<8x128xf32>
    tpu.vector_store %arg6[%c0_23, %c0_24], %57 {strides = array<i32>} : memref<8x128xf32, #tpu.memory_space<vmem>>, vector<8x128xf32>,
    return
  }
  func.func @transform_0(%arg0: i32) -> (i32, i32, i32) {
    %c0_i32 = arith.constant 0 : i32
    %c0_i32_0 = arith.constant 0 : i32
    %c0_i32_1 = arith.constant 0 : i32
    return %arg0, %c0_i32, %c0_i32_0 : i32, i32, i32
  }
  func.func @transform_1(%arg0: i32) -> (i32, i32) {
    %c0_i32 = arith.constant 0 : i32
    %c0_i32_0 = arith.constant 0 : i32
    %c0_i32_1 = arith.constant 0 : i32
    return %c0_i32, %c0_i32_0 : i32, i32
  }
  func.func @transform_2(%arg0: i32) -> (i32, i32) {
    %c0_i32 = arith.constant 0 : i32
    %c0_i32_0 = arith.constant 0 : i32
    %c0_i32_1 = arith.constant 0 : i32
    return %c0_i32, %c0_i32_0 : i32, i32
  }
  func.func @transform_3(%arg0: i32) -> (i32, i32) {
    %c0_i32 = arith.constant 0 : i32
    %c0_i32_0 = arith.constant 0 : i32
    %c0_i32_1 = arith.constant 0 : i32
    return %c0_i32, %c0_i32_0 : i32, i32
  }
  func.func @transform_4(%arg0: i32) -> (i32, i32) {
    %c0_i32 = arith.constant 0 : i32
    %c0_i32_0 = arith.constant 0 : i32
    %c0_i32_1 = arith.constant 0 : i32
    return %c0_i32, %c0_i32_0 : i32, i32
  }
  func.func @transform_5(%arg0: i32) -> (i32, i32) {
    %c0_i32 = arith.constant 0 : i32
    %c0_i32_0 = arith.constant 0 : i32
    return %arg0, %c0_i32 : i32, i32
  }
}

</mosaic_0001>

<llo_original>
// kernel: tpu_custom_call.1
$region0: #{tpu_custom_call.1}
  #allocation0 [shape = 'u32[]', space=smem, size = 0x4, offset = 0x4, fixed_abs, tag = 'smem constant byte address 0x4 - core index']
  #allocation1 [shape = 'u32[144,128]{1,0:T(1,128)}', space=vmem, size = 0x12000, scoped, tag = 'internal scratch']
  %s0 = inlined_call_operand.hbm [shape: bf16[16,16,32], index: 0, kind: input, shape index: {}]
  %s1 = inlined_call_operand.hbm [shape: bf16[32,128], index: 1, kind: input, shape index: {}]
  %s2 = inlined_call_operand.vmem [shape: f32[3,8], index: 2, kind: input, shape index: {}]
  %s3 = inlined_call_operand.hbm [shape: f32[24,128], index: 3, kind: input, shape index: {}]
  %s4 = inlined_call_operand.vmem [shape: f32[1,128], index: 4, kind: input, shape index: {}]
  %s5 = inlined_call_operand.hbm [shape: f32[16,128], index: 5, kind: output, shape index: {}]
  %s6 = sld [smem:[#allocation0]]
  $region65: #{tpu_custom_call.1} parent=0
    _
  %s8 = ssub.s32 1, %s6
  %s9 = scalar_select 0, %s8, %s6
  $region1: #{tpu_custom_call.1} parent=0
    #allocation2 [shape = 'u8[65536]{0}', space=vmem, size = 0x10000, scoped, tag = 'input window, operand 0']
    #allocation3 [shape = 's32[2]{0}', space=sflag, size = 0x8, scoped, tag = 'scoped memory for tpu_custom_call.1']
    #allocation4 [shape = 's32[2]{0}', space=sflag, size = 0x8, scoped, tag = 'scoped memory for tpu_custom_call.1']
    #allocation5 [shape = 'u8[8192]{0}', space=vmem, size = 0x2000, scoped, tag = 'input window, operand 1, single buffered']
    #allocation6 [shape = 's32[1]{0}', space=sflag, size = 0x4, scoped, tag = 'scoped memory for tpu_custom_call.1']
    #allocation7 [shape = 'u8[12288]{0}', space=vmem, size = 0x3000, scoped, tag = 'input window, operand 3, single buffered']
    #allocation8 [shape = 'u8[8192]{0}', space=vmem, size = 0x2000, scoped, tag = 'output window, operand 0']
    %10 = vsyncpa [#allocation3], 0
    %s11 = scalar_lea.sflag [#allocation3], 1
    %12 = vsyncpa %s11, 0
    %13 = vsyncpa [#allocation6], 0
    %14 = vsyncpa [#allocation4], 0
    %s15 = scalar_lea.sflag [#allocation4], 1
    %16 = vsyncpa %s15, 0
    loop: start=0, step=1, limit=4
    $region2: #{tpu_custom_call.1} parent=1 // loop_pre_header
      _
    $region3: #{tpu_custom_call.1} parent=1 // loop_header
      %s18 = sphi 0, %s22
      %p19 = scmp.ge.s32.totalorder %s18, 4
      %s28 = sphi 0, %s30
      %s31 = sphi 0, %s28
      %s32 = sphi 0, %s31
      %s48 = sphi 0, %s32
      %s52 = sphi 0, %s52
      %s54 = sphi 0, %s52
      %s55 = sphi 0, %s54
      %s69 = sphi 0, %s55
      %s73 = sphi 0, %s73
      %s75 = sphi 0, %s73
      %s76 = sphi 0, %s75
      %s90 = sphi 0, %s76
      %s94 = sphi 0, %s94
      %s96 = sphi 0, %s94
      %s97 = sphi 0, %s96
      %s111 = sphi 0, %s97
      %s115 = sphi 0, %s115
      %s117 = sphi 0, %s115
      %s118 = sphi 0, %s117
      %s132 = sphi 0, %s118
      %s138 = sphi 0, %s140
      %s141 = sphi 0, %s138
      %s142 = sphi 0, %s141
      %s158 = sphi 0, %s142
    $region4: #{tpu_custom_call.1} parent=1 // loop_header_branch
      %21 = sbr.rel (%p19) target = $region8
    $region5: #{tpu_custom_call.1} parent=1 // loop_body
      %s23 = ssub.s32 %s18, 1
      %s24 = ssub.s32 %s18, 2
      %s25 = sadd.s32 %s18, 1
      %s26 = ssub.s32 %s18, %s25
      %p27 = scmp.eq.s32.totalorder %s26, 0
      %s29 = sadd.s32 %s28, 1
      %s30 = scalar_select %p27, %s28, %s29
      %p33 = pneg %p27
      %p34 = scmp.eq.s32.totalorder %s18, 1
      %p35 = por %p33, %p34
      %p36 = scmp.ne.s32.totalorder %s28, %s31
      %p37 = scmp.eq.s32.totalorder %s18, 0
      %p38 = por %p36, %p37
      %p39 = scmp.ne.s32.totalorder %s28, %s31
      %p40 = scmp.eq.s32.totalorder %s23, 1
      %p41 = por %p39, %p40
      %p42 = scmp.ne.s32.totalorder %s31, %s32
      %p43 = scmp.eq.s32.totalorder %s23, 0
      %p44 = por %p42, %p43
      %p45 = scmp.ne.s32.totalorder %s31, %s32
      %p46 = scmp.eq.s32.totalorder %s24, 1
      %p47 = por %p45, %p46
      %p49 = scmp.ne.s32.totalorder %s32, %s48
      %p50 = scmp.eq.s32.totalorder %s24, 0
      %p51 = por %p49, %p50
      %s53 = sadd.s32 %s52, 1
      %p56 = scmp.eq.s32.totalorder %s18, 1
      %p57 = scmp.ne.s32.totalorder %s52, %s54
      %p58 = scmp.eq.s32.totalorder %s18, 0
      %p59 = por %p57, %p58
      %p60 = scmp.ne.s32.totalorder %s52, %s54
      %p61 = scmp.eq.s32.totalorder %s23, 1
      %p62 = por %p60, %p61
      %p63 = scmp.ne.s32.totalorder %s54, %s55
      %p64 = scmp.eq.s32.totalorder %s23, 0
      %p65 = por %p63, %p64
      %p66 = scmp.ne.s32.totalorder %s54, %s55
      %p67 = scmp.eq.s32.totalorder %s24, 1
      %p68 = por %p66, %p67
      %p70 = scmp.ne.s32.totalorder %s55, %s69
      %p71 = scmp.eq.s32.totalorder %s24, 0
      %p72 = por %p70, %p71
      %s74 = sadd.s32 %s73, 1
      %p77 = scmp.eq.s32.totalorder %s18, 1
      %p78 = scmp.ne.s32.totalorder %s73, %s75
      %p79 = scmp.eq.s32.totalorder %s18, 0
      %p80 = por %p78, %p79
      %p81 = scmp.ne.s32.totalorder %s73, %s75
      %p82 = scmp.eq.s32.totalorder %s23, 1
      %p83 = por %p81, %p82
      %p84 = scmp.ne.s32.totalorder %s75, %s76
      %p85 = scmp.eq.s32.totalorder %s23, 0
      %p86 = por %p84, %p85
      %p87 = scmp.ne.s32.totalorder %s75, %s76
      %p88 = scmp.eq.s32.totalorder %s24, 1
      %p89 = por %p87, %p88
      %p91 = scmp.ne.s32.totalorder %s76, %s90
      %p92 = scmp.eq.s32.totalorder %s24, 0
      %p93 = por %p91, %p92
      %s95 = sadd.s32 %s94, 1
      %p98 = scmp.eq.s32.totalorder %s18, 1
      %p99 = scmp.ne.s32.totalorder %s94, %s96
      %p100 = scmp.eq.s32.totalorder %s18, 0
      %p101 = por %p99, %p100
      %p102 = scmp.ne.s32.totalorder %s94, %s96
      %p103 = scmp.eq.s32.totalorder %s23, 1
      %p104 = por %p102, %p103
      %p105 = scmp.ne.s32.totalorder %s96, %s97
      %p106 = scmp.eq.s32.totalorder %s23, 0
      %p107 = por %p105, %p106
      %p108 = scmp.ne.s32.totalorder %s96, %s97
      %p109 = scmp.eq.s32.totalorder %s24, 1
      %p110 = por %p108, %p109
      %p112 = scmp.ne.s32.totalorder %s97, %s111
      %p113 = scmp.eq.s32.totalorder %s24, 0
      %p114 = por %p112, %p113
      %s116 = sadd.s32 %s115, 1
      %p119 = scmp.eq.s32.totalorder %s18, 1
      %p120 = scmp.ne.s32.totalorder %s115, %s117
      %p121 = scmp.eq.s32.totalorder %s18, 0
      %p122 = por %p120, %p121
      %p123 = scmp.ne.s32.totalorder %s115, %s117
      %p124 = scmp.eq.s32.totalorder %s23, 1
      %p125 = por %p123, %p124
      %p126 = scmp.ne.s32.totalorder %s117, %s118
      %p127 = scmp.eq.s32.totalorder %s23, 0
      %p128 = por %p126, %p127
      %p129 = scmp.ne.s32.totalorder %s117, %s118
      %p130 = scmp.eq.s32.totalorder %s24, 1
      %p131 = por %p129, %p130
      %p133 = scmp.ne.s32.totalorder %s118, %s132
      %p134 = scmp.eq.s32.totalorder %s24, 0
      %p135 = por %p133, %p134
      %s136 = ssub.s32 %s18, %s25
      %p137 = scmp.eq.s32.totalorder %s136, 0
      %s139 = sadd.s32 %s138, 1
      %s140 = scalar_select %p137, %s138, %s139
      %p143 = pneg %p137
      %p144 = scmp.eq.s32.totalorder %s18, 1
      %p145 = por %p143, %p144
      %p146 = scmp.ne.s32.totalorder %s138, %s141
      %p147 = scmp.eq.s32.totalorder %s18, 0
      %p148 = por %p146, %p147
      %p149 = scmp.ne.s32.totalorder %s138, %s141
      %p150 = scmp.eq.s32.totalorder %s23, 1
      %p151 = por %p149, %p150
      %p152 = scmp.ne.s32.totalorder %s141, %s142
      %p153 = scmp.eq.s32.totalorder %s23, 0
      %p154 = por %p152, %p153
      %p155 = scmp.ne.s32.totalorder %s141, %s142
      %p156 = scmp.eq.s32.totalorder %s24, 1
      %p157 = por %p155, %p156
      %p159 = scmp.ne.s32.totalorder %s142, %s158
      %p160 = scmp.eq.s32.totalorder %s24, 0
      %p161 = por %p159, %p160
      %p162 = scmp.le.s32.totalorder 1, %s18
      %p163 = scmp.lt.s32.totalorder %s18, 3
      %p164 = pnand %p162, %p163
      %p165 = pneg %p164
      // Predicated region
      $region9: #{tpu_custom_call.1} parent=5 // pred_check
        _
      $region10: #{tpu_custom_call.1} parent=5 // pred_check_branch
        %167 = sbr.rel (%p164) target = $region12
      $region11: #{tpu_custom_call.1} parent=5 // pred_region
        %s168 = ssub.s32 %s18, 1
        // Predicated region
        $region13: #{tpu_custom_call.1} parent=11 // pred_check
          %p169 = pneg %p65
        $region14: #{tpu_custom_call.1} parent=11 // pred_check_branch
          %171 = sbr.rel (%p169) target = $region16
        $region15: #{tpu_custom_call.1} parent=11 // pred_region
          %s173 = ssub.s32 256, 256
          %174 = vsyncadd [#allocation6], %s173
          %s175 = sshll.u32 [#allocation5], 4
          %s176 = int_to_ptr.vmem [resolvable:$true] %s175
          %181 = dma.hbm_to_vmem [thread:$0]  %s1, 256, %s176, [#allocation6], 64, 64, 4
        $region16: #{tpu_custom_call.1} parent=11 // pred_fallthru
          _
        // Predicated region
        $region17: #{tpu_custom_call.1} parent=11 // pred_check
          %p182 = pneg %p86
        $region18: #{tpu_custom_call.1} parent=11 // pred_check_branch
          %184 = sbr.rel (%p182) target = $region20
        $region19: #{tpu_custom_call.1} parent=11 // pred_region
          _
        $region20: #{tpu_custom_call.1} parent=11 // pred_fallthru
          _
        // Predicated region
        $region21: #{tpu_custom_call.1} parent=11 // pred_check
          %p185 = pneg %p107
        $region22: #{tpu_custom_call.1} parent=11 // pred_check_branch
          %187 = sbr.rel (%p185) target = $region24
        $region23: #{tpu_custom_call.1} parent=11 // pred_region
          %s189 = ssub.s32 384, 384
          %190 = vsyncadd [#allocation6], %s189
          %s191 = sshll.u32 [#allocation7], 4
          %s192 = int_to_ptr.vmem [resolvable:$true] %s191
          %197 = dma.hbm_to_vmem [thread:$0]  %s3, 384, %s192, [#allocation6], 128, 128, 8
        $region24: #{tpu_custom_call.1} parent=11 // pred_fallthru
          _
        // Predicated region
        $region25: #{tpu_custom_call.1} parent=11 // pred_check
          %p198 = pneg %p128
        $region26: #{tpu_custom_call.1} parent=11 // pred_check_branch
          %200 = sbr.rel (%p198) target = $region28
        $region27: #{tpu_custom_call.1} parent=11 // pred_region
          _
        $region28: #{tpu_custom_call.1} parent=11 // pred_fallthru
          _
      $region12: #{tpu_custom_call.1} parent=5 // pred_fallthru
        _
      %p201 = scmp.lt.s32.totalorder %s18, 2
      // Predicated region
      $region29: #{tpu_custom_call.1} parent=5 // pred_check
        %p202 = pneg %p201
      $region30: #{tpu_custom_call.1} parent=5 // pred_check_branch
        %204 = sbr.rel (%p202) target = $region32
      $region31: #{tpu_custom_call.1} parent=5 // pred_region
        // Predicated region
        $region33: #{tpu_custom_call.1} parent=31 // pred_check
          %p205 = pneg %p38
        $region34: #{tpu_custom_call.1} parent=31 // pred_check_branch
          %207 = sbr.rel (%p205) target = $region36
        $region35: #{tpu_custom_call.1} parent=31 // pred_region
          %s208 = sand.u32 %s28, 1
          %s209 = scalar_lea.sflag [#allocation3], %s208
          %s210 = sand.u32 %s28, 1
          %s211 = smul.addr %s210, 64
          %s212 = scalar_lea.vmem [#allocation2], %s211
          %s213 = smul.u32 8, %s18
          %s215 = ssub.s32 1024, 1024
          %216 = vsyncadd %s209, %s215
          %s217 = smul.addr %s213, 2
          %s218 = smul.addr %s217, 64
          %s219 = scalar_lea.hbm %s0, %s218
          %s220 = sshll.u32 %s212, 4
          %s221 = int_to_ptr.vmem [resolvable:$true] %s220
          %226 = dma.hbm_to_vmem [thread:$0]  %s219, 1024, %s221, %s209, 64, 64, 4
        $region36: #{tpu_custom_call.1} parent=31 // pred_fallthru
          _
      $region32: #{tpu_custom_call.1} parent=5 // pred_fallthru
        _
      %p227 = scmp.le.s32.totalorder 1, %s18
      %p228 = scmp.lt.s32.totalorder %s18, 3
      %p229 = pnand %p227, %p228
      %p230 = pneg %p229
      // Predicated region
      $region37: #{tpu_custom_call.1} parent=5 // pred_check
        _
      $region38: #{tpu_custom_call.1} parent=5 // pred_check_branch
        %232 = sbr.rel (%p229) target = $region40
      $region39: #{tpu_custom_call.1} parent=5 // pred_region
        %s233 = ssub.s32 %s18, 1
        %s234 = sand.u32 %s31, 1
        %s235 = scalar_lea.sflag [#allocation3], %s234
        %s236 = sand.u32 %s31, 1
        %s237 = smul.addr %s236, 64
        %s238 = scalar_lea.vmem [#allocation2], %s237
        // Predicated region
        $region41: #{tpu_custom_call.1} parent=39 // pred_check
          %p239 = pneg %p44
        $region42: #{tpu_custom_call.1} parent=39 // pred_check_branch
          %241 = sbr.rel (%p239) target = $region44
        $region43: #{tpu_custom_call.1} parent=39 // pred_region
          %242 = dma.done %s235, 1024
        $region44: #{tpu_custom_call.1} parent=39 // pred_fallthru
          _
        // Predicated region
        $region45: #{tpu_custom_call.1} parent=39 // pred_check
          %p243 = pneg %p65
        $region46: #{tpu_custom_call.1} parent=39 // pred_check_branch
          %245 = sbr.rel (%p243) target = $region48
        $region47: #{tpu_custom_call.1} parent=39 // pred_region
          %246 = dma.done [#allocation6], 256
        $region48: #{tpu_custom_call.1} parent=39 // pred_fallthru
          _
        // Predicated region
        $region49: #{tpu_custom_call.1} parent=39 // pred_check
          %p247 = pneg %p107
        $region50: #{tpu_custom_call.1} parent=39 // pred_check_branch
          %249 = sbr.rel (%p247) target = $region52
        $region51: #{tpu_custom_call.1} parent=39 // pred_region
          %250 = dma.done [#allocation6], 384
        $region52: #{tpu_custom_call.1} parent=39 // pred_fallthru
          _
        %s251 = sand.u32 %s31, 1
        %s252 = scalar_lea.sflag [#allocation3], %s251
        %s253 = sand.u32 %s31, 1
        %s254 = smul.addr %s253, 64
        %s255 = scalar_lea.vmem [#allocation2], %s254
        %p256 = pneg %p44
        %p257 = pneg %p41
        %p258 = pneg %p65
        %p259 = pneg %p62
        %p260 = pneg %p86
        %p261 = pneg %p83
        %p262 = pneg %p107
        %p263 = pneg %p104
        %p264 = pneg %p128
        %p265 = pneg %p125
        %p266 = pneg %p154
        %p267 = pneg %p151
        %s268 = sand.u32 %s141, 1
        %s269 = scalar_lea.sflag [#allocation4], %s268
        %s270 = sand.u32 %s141, 1
        %s271 = smul.addr %s270, 8
        %s272 = scalar_lea.vmem [#allocation8], %s271
        %s273 = smul.u32 8, %s23
        %v275 = vld [vmem:[%s238] sm:$0xf]
        %v276 = vld [vmem:[%s238 + $0x4] sm:$0xf]
        %v277 = vld [vmem:[%s238 + $0x8] sm:$0xf]
        %v278 = vld [vmem:[%s238 + $0xc] sm:$0xf]
        %v279 = vld [vmem:[%s238 + $0x10] sm:$0xf]
        %v280 = vld [vmem:[%s238 + $0x14] sm:$0xf]
        %v281 = vld [vmem:[%s238 + $0x18] sm:$0xf]
        %v282 = vld [vmem:[%s238 + $0x1c] sm:$0xf]
        %v283 = vld [vmem:[%s238 + $0x20] sm:$0xf]
        %v284 = vld [vmem:[%s238 + $0x24] sm:$0xf]
        %v285 = vld [vmem:[%s238 + $0x28] sm:$0xf]
        %v286 = vld [vmem:[%s238 + $0x2c] sm:$0xf]
        %v287 = vld [vmem:[%s238 + $0x30] sm:$0xf]
        %v288 = vld [vmem:[%s238 + $0x34] sm:$0xf]
        %v289 = vld [vmem:[%s238 + $0x38] sm:$0xf]
        %v290 = vld [vmem:[%s238 + $0x3c] sm:$0xf]
        %v291 = vld [vmem:[#allocation5] sm:$0xf]
        %v292 = vld [vmem:[#allocation5 + $0x4] sm:$0xf]
        %v293 = vld [vmem:[#allocation5 + $0x8] sm:$0xf]
        %v294 = vld [vmem:[#allocation5 + $0xc] sm:$0xf]
        %v311 = vunpack.c.l.b16 %v275
        %v312 = vunpack.c.l.b16 %v276
        %v313 = vunpack.c.l.b16 %v277
        %v314 = vunpack.c.l.b16 %v278
        %v315 = vunpack.c.l.b16 %v279
        %v316 = vunpack.c.l.b16 %v280
        %v317 = vunpack.c.l.b16 %v281
        %v318 = vunpack.c.l.b16 %v282
        %v319 = vunpack.c.l.b16 %v283
        %v320 = vunpack.c.l.b16 %v284
        %v321 = vunpack.c.l.b16 %v285
        %v322 = vunpack.c.l.b16 %v286
        %v323 = vunpack.c.l.b16 %v287
        %v324 = vunpack.c.l.b16 %v288
        %v325 = vunpack.c.l.b16 %v289
        %v326 = vunpack.c.l.b16 %v290
        %v327 = vpack.c.b16 %v312, %v311
        %v328 = vpack.c.b16 %v314, %v313
        %v329 = vpack.c.b16 %v316, %v315
        %v330 = vpack.c.b16 %v318, %v317
        %v331 = vpack.c.b16 %v320, %v319
        %v332 = vpack.c.b16 %v322, %v321
        %v333 = vpack.c.b16 %v324, %v323
        %v334 = vpack.c.b16 %v326, %v325
        %v339 = vunpack.c.l.b16 %v291
        %v340 = vunpack.c.l.b16 %v292
        %v341 = vunpack.c.l.b16 %v293
        %v342 = vunpack.c.l.b16 %v294
        %v343 = vpack.c.b16 %v340, %v339
        %v344 = vpack.c.b16 %v342, %v341
        %vm347 = vcmask 261120
        %v349 = vsel %vm347, %v327, 0
        %v352 = vsel %vm347, %v328, 0
        %v355 = vsel %vm347, %v329, 0
        %v358 = vsel %vm347, %v330, 0
        %v361 = vsel %vm347, %v331, 0
        %v364 = vsel %vm347, %v332, 0
        %v367 = vsel %vm347, %v333, 0
        %v370 = vsel %vm347, %v334, 0
        %372 = vmatprep.subr.bf16.mxu0 0
        %373 = vmatpush1.bf16.msra.mxu0 %v343
        %374 = vmatprep.subr.bf16.mxu0 0
        %375 = vmatpush1.bf16.msra.mxu0 %v344
        %376 = vmatprep.subr.bf16.mxu0 0
        %377 = vmatpush1.bf16.msra.mxu0 0
        %378 = vmatprep.subr.bf16.mxu0 0
        %379 = vmatpush1.bf16.msra.mxu0 0
        %380 = vmatprep.subr.bf16.mxu0 0
        %381 = vmatpush1.bf16.msra.mxu0 0
        %382 = vmatprep.subr.bf16.mxu0 0
        %383 = vmatpush1.bf16.msra.mxu0 0
        %384 = vmatprep.subr.bf16.mxu0 0
        %385 = vmatpush1.bf16.msra.mxu0 0
        %386 = vmatprep.subr.bf16.mxu0 0
        %387 = vmatpush1.bf16.msra.mxu0 0
        %388 = vmatprep.subr.bf16.mxu0 0
        %389 = vmatpush1.bf16.msra.mxu0 0
        %390 = vmatprep.subr.bf16.mxu0 0
        %391 = vmatpush1.bf16.msra.mxu0 0
        %392 = vmatprep.subr.bf16.mxu0 0
        %393 = vmatpush1.bf16.msra.mxu0 0
        %394 = vmatprep.subr.bf16.mxu0 0
        %395 = vmatpush1.bf16.msra.mxu0 0
        %396 = vmatprep.subr.bf16.mxu0 0
        %397 = vmatpush1.bf16.msra.mxu0 0
        %398 = vmatprep.subr.bf16.mxu0 0
        %399 = vmatpush1.bf16.msra.mxu0 0
        %400 = vmatprep.subr.bf16.mxu0 0
        %401 = vmatpush1.bf16.msra.mxu0 0
        %402 = vmatprep.subr.bf16.mxu0 0
        %403 = vmatpush1.bf16.msra.mxu0 0
        %404 = vmatprep.mubr.bf16.mxu0 0
        %405 = vmatmul.mubr.bf16.gmra.mrb[0].mxu0 %v349
        %v406 = vpop.f32.mrb[0].mxu0
        %v407 = vadd.f32 0.0, %v406
        %v408 = vpop.f32.mrb[0].mxu0
        %v409 = vpop.f32.mrb[0].mxu0
        %v410 = vadd.f32 0.0, %v409
        %v411 = vpop.f32.mrb[0].mxu0
        %412 = vmatprep.mubr.bf16.mxu0 0
        %413 = vmatmul.mubr.bf16.gmra.mrb[0].mxu0 %v352
        %v414 = vpop.f32.mrb[0].mxu0
        %v415 = vadd.f32 0.0, %v414
        %v416 = vpop.f32.mrb[0].mxu0
        %v417 = vpop.f32.mrb[0].mxu0
        %v418 = vadd.f32 0.0, %v417
        %v419 = vpop.f32.mrb[0].mxu0
        %420 = vmatprep.mubr.bf16.mxu0 0
        %421 = vmatmul.mubr.bf16.gmra.mrb[0].mxu0 %v355
        %v422 = vpop.f32.mrb[0].mxu0
        %v423 = vadd.f32 0.0, %v422
        %v424 = vpop.f32.mrb[0].mxu0
        %v425 = vpop.f32.mrb[0].mxu0
        %v426 = vadd.f32 0.0, %v425
        %v427 = vpop.f32.mrb[0].mxu0
        %428 = vmatprep.mubr.bf16.mxu0 0
        %429 = vmatmul.mubr.bf16.gmra.mrb[0].mxu0 %v358
        %v430 = vpop.f32.mrb[0].mxu0
        %v431 = vadd.f32 0.0, %v430
        %v432 = vpop.f32.mrb[0].mxu0
        %v433 = vpop.f32.mrb[0].mxu0
        %v434 = vadd.f32 0.0, %v433
        %v435 = vpop.f32.mrb[0].mxu0
        %436 = vmatprep.mubr.bf16.mxu0 0
        %437 = vmatmul.mubr.bf16.gmra.mrb[0].mxu0 %v361
        %v438 = vpop.f32.mrb[0].mxu0
        %v439 = vadd.f32 0.0, %v438
        %v440 = vpop.f32.mrb[0].mxu0
        %v441 = vpop.f32.mrb[0].mxu0
        %v442 = vadd.f32 0.0, %v441
        %v443 = vpop.f32.mrb[0].mxu0
        %444 = vmatprep.mubr.bf16.mxu0 0
        %445 = vmatmul.mubr.bf16.gmra.mrb[0].mxu0 %v364
        %v446 = vpop.f32.mrb[0].mxu0
        %v447 = vadd.f32 0.0, %v446
        %v448 = vpop.f32.mrb[0].mxu0
        %v449 = vpop.f32.mrb[0].mxu0
        %v450 = vadd.f32 0.0, %v449
        %v451 = vpop.f32.mrb[0].mxu0
        %452 = vmatprep.mubr.bf16.mxu0 0
        %453 = vmatmul.mubr.bf16.gmra.mrb[0].mxu0 %v367
        %v454 = vpop.f32.mrb[0].mxu0
        %v455 = vadd.f32 0.0, %v454
        %v456 = vpop.f32.mrb[0].mxu0
        %v457 = vpop.f32.mrb[0].mxu0
        %v458 = vadd.f32 0.0, %v457
        %v459 = vpop.f32.mrb[0].mxu0
        %460 = vmatprep.mubr.bf16.mxu0 0
        %461 = vmatmul.mubr.bf16.gmra.mrb[0].mxu0 %v370
        %v462 = vpop.f32.mrb[0].mxu0
        %v463 = vadd.f32 0.0, %v462
        %v464 = vpop.f32.mrb[0].mxu0
        %v465 = vpop.f32.mrb[0].mxu0
        %v466 = vadd.f32 0.0, %v465
        %v467 = vpop.f32.mrb[0].mxu0
        %468 = vdwg.mxu0
        %v469 = vld [vmem:[%s4] sm:$0x1]
        %vm486 = vcmask 1046528
        %v487 = vrot.slane %v407, 1
        %v488 = vrot.slane %v410, 1
        %v489 = vsel %vm486, %v487, %v488
        %v490 = vrot.slane %v415, 1
        %v491 = vrot.slane %v418, 1
        %v492 = vsel %vm486, %v490, %v491
        %v493 = vrot.slane %v423, 1
        %v494 = vrot.slane %v426, 1
        %v495 = vsel %vm486, %v493, %v494
        %v496 = vrot.slane %v431, 1
        %v497 = vrot.slane %v434, 1
        %v498 = vsel %vm486, %v496, %v497
        %v499 = vrot.slane %v439, 1
        %v500 = vrot.slane %v442, 1
        %v501 = vsel %vm486, %v499, %v500
        %v502 = vrot.slane %v447, 1
        %v503 = vrot.slane %v450, 1
        %v504 = vsel %vm486, %v502, %v503
        %v505 = vrot.slane %v455, 1
        %v506 = vrot.slane %v458, 1
        %v507 = vsel %vm486, %v505, %v506
        %v508 = vrot.slane %v463, 1
        %v509 = vrot.slane %v466, 1
        %v510 = vsel %vm486, %v508, %v509
        %511 = vrot.lane.b32.xlu0 %v489, 120
        %v512 = vpop.permute.xlu0 %511
        %513 = vrot.lane.b32.xlu0 %v488, 120
        %v514 = vpop.permute.xlu0 %513
        %515 = vrot.lane.b32.xlu0 %v492, 120
        %v516 = vpop.permute.xlu0 %515
        %517 = vrot.lane.b32.xlu0 %v491, 120
        %v518 = vpop.permute.xlu0 %517
        %519 = vrot.lane.b32.xlu0 %v495, 120
        %v520 = vpop.permute.xlu0 %519
        %521 = vrot.lane.b32.xlu0 %v494, 120
        %v522 = vpop.permute.xlu0 %521
        %523 = vrot.lane.b32.xlu0 %v498, 120
        %v524 = vpop.permute.xlu0 %523
        %525 = vrot.lane.b32.xlu0 %v497, 120
        %v526 = vpop.permute.xlu0 %525
        %527 = vrot.lane.b32.xlu0 %v501, 120
        %v528 = vpop.permute.xlu0 %527
        %529 = vrot.lane.b32.xlu0 %v500, 120
        %v530 = vpop.permute.xlu0 %529
        %531 = vrot.lane.b32.xlu0 %v504, 120
        %v532 = vpop.permute.xlu0 %531
        %533 = vrot.lane.b32.xlu0 %v503, 120
        %v534 = vpop.permute.xlu0 %533
        %535 = vrot.lane.b32.xlu0 %v507, 120
        %v536 = vpop.permute.xlu0 %535
        %537 = vrot.lane.b32.xlu0 %v506, 120
        %v538 = vpop.permute.xlu0 %537
        %539 = vrot.lane.b32.xlu0 %v510, 120
        %v540 = vpop.permute.xlu0 %539
        %541 = vrot.lane.b32.xlu0 %v509, 120
        %v542 = vpop.permute.xlu0 %541
        %v559 = vadd.f32 %v407, %v512
        %v560 = vadd.f32 %v410, %v514
        %v561 = vadd.f32 %v415, %v516
        %v562 = vadd.f32 %v418, %v518
        %v563 = vadd.f32 %v423, %v520
        %v564 = vadd.f32 %v426, %v522
        %v565 = vadd.f32 %v431, %v524
        %v566 = vadd.f32 %v434, %v526
        %v567 = vadd.f32 %v439, %v528
        %v568 = vadd.f32 %v442, %v530
        %v569 = vadd.f32 %v447, %v532
        %v570 = vadd.f32 %v450, %v534
        %v571 = vadd.f32 %v455, %v536
        %v572 = vadd.f32 %v458, %v538
        %v573 = vadd.f32 %v463, %v540
        %v574 = vadd.f32 %v466, %v542
        %vm575 = vcmask 1045504
        %v576 = vrot.slane %v407, 2
        %v577 = vrot.slane %v410, 2
        %v578 = vsel %vm575, %v576, %v577
        %v579 = vrot.slane %v415, 2
        %v580 = vrot.slane %v418, 2
        %v581 = vsel %vm575, %v579, %v580
        %v582 = vrot.slane %v423, 2
        %v583 = vrot.slane %v426, 2
        %v584 = vsel %vm575, %v582, %v583
        %v585 = vrot.slane %v431, 2
        %v586 = vrot.slane %v434, 2
        %v587 = vsel %vm575, %v585, %v586
        %v588 = vrot.slane %v439, 2
        %v589 = vrot.slane %v442, 2
        %v590 = vsel %vm575, %v588, %v589
        %v591 = vrot.slane %v447, 2
        %v592 = vrot.slane %v450, 2
        %v593 = vsel %vm575, %v591, %v592
        %v594 = vrot.slane %v455, 2
        %v595 = vrot.slane %v458, 2
        %v596 = vsel %vm575, %v594, %v595
        %v597 = vrot.slane %v463, 2
        %v598 = vrot.slane %v466, 2
        %v599 = vsel %vm575, %v597, %v598
        %600 = vrot.lane.b32.xlu0 %v578, 112
        %v601 = vpop.permute.xlu0 %600
        %602 = vrot.lane.b32.xlu0 %v577, 112
        %v603 = vpop.permute.xlu0 %602
        %604 = vrot.lane.b32.xlu0 %v581, 112
        %v605 = vpop.permute.xlu0 %604
        %606 = vrot.lane.b32.xlu0 %v580, 112
        %v607 = vpop.permute.xlu0 %606
        %608 = vrot.lane.b32.xlu0 %v584, 112
        %v609 = vpop.permute.xlu0 %608
        %610 = vrot.lane.b32.xlu0 %v583, 112
        %v611 = vpop.permute.xlu0 %610
        %612 = vrot.lane.b32.xlu0 %v587, 112
        %v613 = vpop.permute.xlu0 %612
        %614 = vrot.lane.b32.xlu0 %v586, 112
        %v615 = vpop.permute.xlu0 %614
        %616 = vrot.lane.b32.xlu0 %v590, 112
        %v617 = vpop.permute.xlu0 %616
        %618 = vrot.lane.b32.xlu0 %v589, 112
        %v619 = vpop.permute.xlu0 %618
        %620 = vrot.lane.b32.xlu0 %v593, 112
        %v621 = vpop.permute.xlu0 %620
        %622 = vrot.lane.b32.xlu0 %v592, 112
        %v623 = vpop.permute.xlu0 %622
        %624 = vrot.lane.b32.xlu0 %v596, 112
        %v625 = vpop.permute.xlu0 %624
        %626 = vrot.lane.b32.xlu0 %v595, 112
        %v627 = vpop.permute.xlu0 %626
        %628 = vrot.lane.b32.xlu0 %v599, 112
        %v629 = vpop.permute.xlu0 %628
        %630 = vrot.lane.b32.xlu0 %v598, 112
        %v631 = vpop.permute.xlu0 %630
        %v648 = vadd.f32 %v559, %v601
        %v649 = vadd.f32 %v560, %v603
        %v650 = vadd.f32 %v561, %v605
        %v651 = vadd.f32 %v562, %v607
        %v652 = vadd.f32 %v563, %v609
        %v653 = vadd.f32 %v564, %v611
        %v654 = vadd.f32 %v565, %v613
        %v655 = vadd.f32 %v566, %v615
        %v656 = vadd.f32 %v567, %v617
        %v657 = vadd.f32 %v568, %v619
        %v658 = vadd.f32 %v569, %v621
        %v659 = vadd.f32 %v570, %v623
        %v660 = vadd.f32 %v571, %v625
        %v661 = vadd.f32 %v572, %v627
        %v662 = vadd.f32 %v573, %v629
        %v663 = vadd.f32 %v574, %v631
        %v664 = vld [vmem:[%s2] sm:$0x1]
        %v665 = vlaneseq
        %v666 = vshrl.u32 %v665, 7
        %v667 = vsub.s32 0, %v666
        %v668 = vrot.slane %v664, %v667
        %v669 = vadd.f32 %v648, %v668
        %v670 = vadd.f32 %v649, %v668
        %v671 = vadd.f32 %v650, %v668
        %v672 = vadd.f32 %v651, %v668
        %v673 = vadd.f32 %v652, %v668
        %v674 = vadd.f32 %v653, %v668
        %v675 = vadd.f32 %v654, %v668
        %v676 = vadd.f32 %v655, %v668
        %v677 = vadd.f32 %v656, %v668
        %v678 = vadd.f32 %v657, %v668
        %v679 = vadd.f32 %v658, %v668
        %v680 = vadd.f32 %v659, %v668
        %v681 = vadd.f32 %v660, %v668
        %v682 = vadd.f32 %v661, %v668
        %v683 = vadd.f32 %v662, %v668
        %v684 = vadd.f32 %v663, %v668
        %v685 = vmax.f32 %v669, 0.0
        %v686 = vmax.f32 %v670, 0.0
        %v687 = vmax.f32 %v671, 0.0
        %v688 = vmax.f32 %v672, 0.0
        %v689 = vmax.f32 %v673, 0.0
        %v690 = vmax.f32 %v674, 0.0
        %v691 = vmax.f32 %v675, 0.0
        %v692 = vmax.f32 %v676, 0.0
        %v693 = vmax.f32 %v677, 0.0
        %v694 = vmax.f32 %v678, 0.0
        %v695 = vmax.f32 %v679, 0.0
        %v696 = vmax.f32 %v680, 0.0
        %v697 = vmax.f32 %v681, 0.0
        %v698 = vmax.f32 %v682, 0.0
        %v699 = vmax.f32 %v683, 0.0
        %v700 = vmax.f32 %v684, 0.0
        %vm701 = vcmask 64512
        %v702 = vsel %vm701, %v685, -inf
        %vm703 = vcmask 62464
        %v704 = vsel %vm703, %v686, -inf
        %v705 = vmax.f32 %v702, %v704
        %v706 = vrot.slane %v705, 4
        %v707 = vmax.f32 %v705, %v706
        %v708 = vrot.slane %v707, 2
        %v709 = vmax.f32 %v707, %v708
        %v710 = vrot.slane %v709, 1
        %v711 = vmax.f32 %v709, %v710
        %v712 = vsel %vm701, %v687, -inf
        %v713 = vsel %vm703, %v688, -inf
        %v714 = vmax.f32 %v712, %v713
        %v715 = vrot.slane %v714, 4
        %v716 = vmax.f32 %v714, %v715
        %v717 = vrot.slane %v716, 2
        %v718 = vmax.f32 %v716, %v717
        %v719 = vrot.slane %v718, 1
        %v720 = vmax.f32 %v718, %v719
        %v721 = vsel %vm701, %v689, -inf
        %v722 = vsel %vm703, %v690, -inf
        %v723 = vmax.f32 %v721, %v722
        %v724 = vrot.slane %v723, 4
        %v725 = vmax.f32 %v723, %v724
        %v726 = vrot.slane %v725, 2
        %v727 = vmax.f32 %v725, %v726
        %v728 = vrot.slane %v727, 1
        %v729 = vmax.f32 %v727, %v728
        %v730 = vsel %vm701, %v691, -inf
        %v731 = vsel %vm703, %v692, -inf
        %v732 = vmax.f32 %v730, %v731
        %v733 = vrot.slane %v732, 4
        %v734 = vmax.f32 %v732, %v733
        %v735 = vrot.slane %v734, 2
        %v736 = vmax.f32 %v734, %v735
        %v737 = vrot.slane %v736, 1
        %v738 = vmax.f32 %v736, %v737
        %v739 = vsel %vm701, %v693, -inf
        %v740 = vsel %vm703, %v694, -inf
        %v741 = vmax.f32 %v739, %v740
        %v742 = vrot.slane %v741, 4
        %v743 = vmax.f32 %v741, %v742
        %v744 = vrot.slane %v743, 2
        %v745 = vmax.f32 %v743, %v744
        %v746 = vrot.slane %v745, 1
        %v747 = vmax.f32 %v745, %v746
        %v748 = vsel %vm701, %v695, -inf
        %v749 = vsel %vm703, %v696, -inf
        %v750 = vmax.f32 %v748, %v749
        %v751 = vrot.slane %v750, 4
        %v752 = vmax.f32 %v750, %v751
        %v753 = vrot.slane %v752, 2
        %v754 = vmax.f32 %v752, %v753
        %v755 = vrot.slane %v754, 1
        %v756 = vmax.f32 %v754, %v755
        %v757 = vsel %vm701, %v697, -inf
        %v758 = vsel %vm703, %v698, -inf
        %v759 = vmax.f32 %v757, %v758
        %v760 = vrot.slane %v759, 4
        %v761 = vmax.f32 %v759, %v760
        %v762 = vrot.slane %v761, 2
        %v763 = vmax.f32 %v761, %v762
        %v764 = vrot.slane %v763, 1
        %v765 = vmax.f32 %v763, %v764
        %v766 = vsel %vm701, %v699, -inf
        %v767 = vsel %vm703, %v700, -inf
        %v768 = vmax.f32 %v766, %v767
        %v769 = vrot.slane %v768, 4
        %v770 = vmax.f32 %v768, %v769
        %v771 = vrot.slane %v770, 2
        %v772 = vmax.f32 %v770, %v771
        %v773 = vrot.slane %v772, 1
        %v774 = vmax.f32 %v772, %v773
        %v775 = vld [vmem:[#allocation7] sm:$0xff]
        %vm784 = vcmask 1041409
        %v785 = vsel %vm784, %v720, %v711
        %vm786 = vcmask 1042434
        %v787 = vsel %vm786, %v729, %v785
        %vm788 = vcmask 1043459
        %v789 = vsel %vm788, %v738, %v787
        %vm790 = vcmask 1044484
        %v791 = vsel %vm790, %v747, %v789
        %vm792 = vcmask 1045509
        %v793 = vsel %vm792, %v756, %v791
        %vm794 = vcmask 1046534
        %v795 = vsel %vm794, %v765, %v793
        %vm796 = vcmask 1047559
        %v797 = vsel %vm796, %v774, %v795
        %v798 = vsel %vm701, %v797, 0
        %800 = vmatprep.subr.mxu0 0.0
        %801 = vmatpush1.msra.mxu0 %v775
        %802 = vmatprep.subr.mxu0 0.0
        %803 = vmatpush1.msra.mxu0 0.0
        %804 = vmatprep.subr.mxu0 0.0
        %805 = vmatpush1.msra.mxu0 0.0
        %806 = vmatprep.subr.mxu0 0.0
        %807 = vmatpush1.msra.mxu0 0.0
        %808 = vmatprep.subr.mxu0 0.0
        %809 = vmatpush1.msra.mxu0 0.0
        %810 = vmatprep.subr.mxu0 0.0
        %811 = vmatpush1.msra.mxu0 0.0
        %812 = vmatprep.subr.mxu0 0.0
        %813 = vmatpush1.msra.mxu0 0.0
        %814 = vmatprep.subr.mxu0 0.0
        %815 = vmatpush1.msra.mxu0 0.0
        %816 = vmatprep.subr.mxu0 0.0
        %817 = vmatpush1.msra.mxu0 0.0
        %818 = vmatprep.subr.mxu0 0.0
        %819 = vmatpush1.msra.mxu0 0.0
        %820 = vmatprep.subr.mxu0 0.0
        %821 = vmatpush1.msra.mxu0 0.0
        %822 = vmatprep.subr.mxu0 0.0
        %823 = vmatpush1.msra.mxu0 0.0
        %824 = vmatprep.subr.mxu0 0.0
        %825 = vmatpush1.msra.mxu0 0.0
        %826 = vmatprep.subr.mxu0 0.0
        %827 = vmatpush1.msra.mxu0 0.0
        %828 = vmatprep.subr.mxu0 0.0
        %829 = vmatpush1.msra.mxu0 0.0
        %830 = vmatprep.subr.mxu0 0.0
        %831 = vmatpush1.msra.mxu0 0.0
        %832 = vmatprep.subr.mxu0 0.0
        %833 = vmatpush1.msra.mxu0 0.0
        %834 = vmatprep.subr.mxu0 0.0
        %835 = vmatpush1.msra.mxu0 0.0
        %836 = vmatprep.subr.mxu0 0.0
        %837 = vmatpush1.msra.mxu0 0.0
        %838 = vmatprep.subr.mxu0 0.0
        %839 = vmatpush1.msra.mxu0 0.0
        %840 = vmatprep.subr.mxu0 0.0
        %841 = vmatpush1.msra.mxu0 0.0
        %842 = vmatprep.subr.mxu0 0.0
        %843 = vmatpush1.msra.mxu0 0.0
        %844 = vmatprep.subr.mxu0 0.0
        %845 = vmatpush1.msra.mxu0 0.0
        %846 = vmatprep.subr.mxu0 0.0
        %847 = vmatpush1.msra.mxu0 0.0
        %848 = vmatprep.subr.mxu0 0.0
        %849 = vmatpush1.msra.mxu0 0.0
        %850 = vmatprep.subr.mxu0 0.0
        %851 = vmatpush1.msra.mxu0 0.0
        %852 = vmatprep.subr.mxu0 0.0
        %853 = vmatpush1.msra.mxu0 0.0
        %854 = vmatprep.subr.mxu0 0.0
        %855 = vmatpush1.msra.mxu0 0.0
        %856 = vmatprep.subr.mxu0 0.0
        %857 = vmatpush1.msra.mxu0 0.0
        %858 = vmatprep.subr.mxu0 0.0
        %859 = vmatpush1.msra.mxu0 0.0
        %860 = vmatprep.subr.mxu0 0.0
        %861 = vmatpush1.msra.mxu0 0.0
        %862 = vmatprep.subr.mxu0 0.0
        %863 = vmatpush1.msra.mxu0 0.0
        %864 = vmatprep.mubr.f32.mxu0 0.0
        %865 = vmatmul.mubr.f32.gmra.mrb[0].mxu0 %v798
        %v866 = vpop.f32.mrb[0].mxu0
        %v867 = vadd.f32 0.0, %v866
        %v868 = vpop.f32.mrb[0].mxu0
        %869 = vdwg.mxu0
        %v871 = vlaneseq
        %v872 = vshrl.u32 %v871, 7
        %v873 = vsub.s32 0, %v872
        %v874 = vrot.slane %v469, %v873
        %v876 = vadd.f32 %v874, %v867
        %vm877 = vcmask 1044480
        %v878 = vrot.slane %v407, 3
        %v879 = vrot.slane %v410, 3
        %v880 = vsel %vm877, %v878, %v879
        %v881 = vrot.slane %v415, 3
        %v882 = vrot.slane %v418, 3
        %v883 = vsel %vm877, %v881, %v882
        %v884 = vrot.slane %v423, 3
        %v885 = vrot.slane %v426, 3
        %v886 = vsel %vm877, %v884, %v885
        %v887 = vrot.slane %v431, 3
        %v888 = vrot.slane %v434, 3
        %v889 = vsel %vm877, %v887, %v888
        %v890 = vrot.slane %v439, 3
        %v891 = vrot.slane %v442, 3
        %v892 = vsel %vm877, %v890, %v891
        %v893 = vrot.slane %v447, 3
        %v894 = vrot.slane %v450, 3
        %v895 = vsel %vm877, %v893, %v894
        %v896 = vrot.slane %v455, 3
        %v897 = vrot.slane %v458, 3
        %v898 = vsel %vm877, %v896, %v897
        %v899 = vrot.slane %v463, 3
        %v900 = vrot.slane %v466, 3
        %v901 = vsel %vm877, %v899, %v900
        %902 = vrot.lane.b32.xlu0 %v880, 104
        %v903 = vpop.permute.xlu0 %902
        %904 = vrot.lane.b32.xlu0 %v879, 104
        %v905 = vpop.permute.xlu0 %904
        %906 = vrot.lane.b32.xlu0 %v883, 104
        %v907 = vpop.permute.xlu0 %906
        %908 = vrot.lane.b32.xlu0 %v882, 104
        %v909 = vpop.permute.xlu0 %908
        %910 = vrot.lane.b32.xlu0 %v886, 104
        %v911 = vpop.permute.xlu0 %910
        %912 = vrot.lane.b32.xlu0 %v885, 104
        %v913 = vpop.permute.xlu0 %912
        %914 = vrot.lane.b32.xlu0 %v889, 104
        %v915 = vpop.permute.xlu0 %914
        %916 = vrot.lane.b32.xlu0 %v888, 104
        %v917 = vpop.permute.xlu0 %916
        %918 = vrot.lane.b32.xlu0 %v892, 104
        %v919 = vpop.permute.xlu0 %918
        %920 = vrot.lane.b32.xlu0 %v891, 104
        %v921 = vpop.permute.xlu0 %920
        %922 = vrot.lane.b32.xlu0 %v895, 104
        %v923 = vpop.permute.xlu0 %922
        %924 = vrot.lane.b32.xlu0 %v894, 104
        %v925 = vpop.permute.xlu0 %924
        %926 = vrot.lane.b32.xlu0 %v898, 104
        %v927 = vpop.permute.xlu0 %926
        %928 = vrot.lane.b32.xlu0 %v897, 104
        %v929 = vpop.permute.xlu0 %928
        %930 = vrot.lane.b32.xlu0 %v901, 104
        %v931 = vpop.permute.xlu0 %930
        %932 = vrot.lane.b32.xlu0 %v900, 104
        %v933 = vpop.permute.xlu0 %932
        %v950 = vadd.f32 %v648, %v903
        %v951 = vadd.f32 %v649, %v905
        %v952 = vadd.f32 %v650, %v907
        %v953 = vadd.f32 %v651, %v909
        %v954 = vadd.f32 %v652, %v911
        %v955 = vadd.f32 %v653, %v913
        %v956 = vadd.f32 %v654, %v915
        %v957 = vadd.f32 %v655, %v917
        %v958 = vadd.f32 %v656, %v919
        %v959 = vadd.f32 %v657, %v921
        %v960 = vadd.f32 %v658, %v923
        %v961 = vadd.f32 %v659, %v925
        %v962 = vadd.f32 %v660, %v927
        %v963 = vadd.f32 %v661, %v929
        %v964 = vadd.f32 %v662, %v931
        %v965 = vadd.f32 %v663, %v933
        %v966 = vld [vmem:[%s2 + $0x1] sm:$0x1]
        %v967 = vlaneseq
        %v968 = vshrl.u32 %v967, 7
        %v969 = vsub.s32 0, %v968
        %v970 = vrot.slane %v966, %v969
        %972 = vrot.lane.b32.xlu0 %v970, 24
        %v973 = vpop.permute.xlu0 %972
        %v975 = vadd.f32 %v950, %v973
        %v976 = vadd.f32 %v951, %v973
        %v977 = vadd.f32 %v952, %v973
        %v978 = vadd.f32 %v953, %v973
        %v979 = vadd.f32 %v954, %v973
        %v980 = vadd.f32 %v955, %v973
        %v981 = vadd.f32 %v956, %v973
        %v982 = vadd.f32 %v957, %v973
        %v983 = vadd.f32 %v958, %v973
        %v984 = vadd.f32 %v959, %v973
        %v985 = vadd.f32 %v960, %v973
        %v986 = vadd.f32 %v961, %v973
        %v987 = vadd.f32 %v962, %v973
        %v988 = vadd.f32 %v963, %v973
        %v989 = vadd.f32 %v964, %v973
        %v990 = vadd.f32 %v965, %v973
        %v991 = vmax.f32 %v975, 0.0
        %v992 = vmax.f32 %v976, 0.0
        %v993 = vmax.f32 %v977, 0.0
        %v994 = vmax.f32 %v978, 0.0
        %v995 = vmax.f32 %v979, 0.0
        %v996 = vmax.f32 %v980, 0.0
        %v997 = vmax.f32 %v981, 0.0
        %v998 = vmax.f32 %v982, 0.0
        %v999 = vmax.f32 %v983, 0.0
        %v1000 = vmax.f32 %v984, 0.0
        %v1001 = vmax.f32 %v985, 0.0
        %v1002 = vmax.f32 %v986, 0.0
        %v1003 = vmax.f32 %v987, 0.0
        %v1004 = vmax.f32 %v988, 0.0
        %v1005 = vmax.f32 %v989, 0.0
        %v1006 = vmax.f32 %v990, 0.0
        %vm1007 = vcmask 261312
        %v1008 = vsel %vm1007, %v991, -inf
        %vm1009 = vcmask 258240
        %v1010 = vsel %vm1009, %v992, -inf
        %v1011 = vmax.f32 %v1008, %v1010
        %v1012 = vrot.slane %v1011, 4
        %v1013 = vmax.f32 %v1011, %v1012
        %v1014 = vrot.slane %v1013, 2
        %v1015 = vmax.f32 %v1013, %v1014
        %v1016 = vrot.slane %v1015, 1
        %v1017 = vmax.f32 %v1015, %v1016
        %v1018 = vsel %vm1007, %v993, -inf
        %v1019 = vsel %vm1009, %v994, -inf
        %v1020 = vmax.f32 %v1018, %v1019
        %v1021 = vrot.slane %v1020, 4
        %v1022 = vmax.f32 %v1020, %v1021
        %v1023 = vrot.slane %v1022, 2
        %v1024 = vmax.f32 %v1022, %v1023
        %v1025 = vrot.slane %v1024, 1
        %v1026 = vmax.f32 %v1024, %v1025
        %v1027 = vsel %vm1007, %v995, -inf
        %v1028 = vsel %vm1009, %v996, -inf
        %v1029 = vmax.f32 %v1027, %v1028
        %v1030 = vrot.slane %v1029, 4
        %v1031 = vmax.f32 %v1029, %v1030
        %v1032 = vrot.slane %v1031, 2
        %v1033 = vmax.f32 %v1031, %v1032
        %v1034 = vrot.slane %v1033, 1
        %v1035 = vmax.f32 %v1033, %v1034
        %v1036 = vsel %vm1007, %v997, -inf
        %v1037 = vsel %vm1009, %v998, -inf
        %v1038 = vmax.f32 %v1036, %v1037
        %v1039 = vrot.slane %v1038, 4
        %v1040 = vmax.f32 %v1038, %v1039
        %v1041 = vrot.slane %v1040, 2
        %v1042 = vmax.f32 %v1040, %v1041
        %v1043 = vrot.slane %v1042, 1
        %v1044 = vmax.f32 %v1042, %v1043
        %v1045 = vsel %vm1007, %v999, -inf
        %v1046 = vsel %vm1009, %v1000, -inf
        %v1047 = vmax.f32 %v1045, %v1046
        %v1048 = vrot.slane %v1047, 4
        %v1049 = vmax.f32 %v1047, %v1048
        %v1050 = vrot.slane %v1049, 2
        %v1051 = vmax.f32 %v1049, %v1050
        %v1052 = vrot.slane %v1051, 1
        %v1053 = vmax.f32 %v1051, %v1052
        %v1054 = vsel %vm1007, %v1001, -inf
        %v1055 = vsel %vm1009, %v1002, -inf
        %v1056 = vmax.f32 %v1054, %v1055
        %v1057 = vrot.slane %v1056, 4
        %v1058 = vmax.f32 %v1056, %v1057
        %v1059 = vrot.slane %v1058, 2
        %v1060 = vmax.f32 %v1058, %v1059
        %v1061 = vrot.slane %v1060, 1
        %v1062 = vmax.f32 %v1060, %v1061
        %v1063 = vsel %vm1007, %v1003, -inf
        %v1064 = vsel %vm1009, %v1004, -inf
        %v1065 = vmax.f32 %v1063, %v1064
        %v1066 = vrot.slane %v1065, 4
        %v1067 = vmax.f32 %v1065, %v1066
        %v1068 = vrot.slane %v1067, 2
        %v1069 = vmax.f32 %v1067, %v1068
        %v1070 = vrot.slane %v1069, 1
        %v1071 = vmax.f32 %v1069, %v1070
        %v1072 = vsel %vm1007, %v1005, -inf
        %v1073 = vsel %vm1009, %v1006, -inf
        %v1074 = vmax.f32 %v1072, %v1073
        %v1075 = vrot.slane %v1074, 4
        %v1076 = vmax.f32 %v1074, %v1075
        %v1077 = vrot.slane %v1076, 2
        %v1078 = vmax.f32 %v1076, %v1077
        %v1079 = vrot.slane %v1078, 1
        %v1080 = vmax.f32 %v1078, %v1079
        %v1081 = vld [vmem:[#allocation7 + $0x8] sm:$0xff]
        %v1090 = vsel %vm784, %v1026, %v1017
        %v1091 = vsel %vm786, %v1035, %v1090
        %v1092 = vsel %vm788, %v1044, %v1091
        %v1093 = vsel %vm790, %v1053, %v1092
        %v1094 = vsel %vm792, %v1062, %v1093
        %v1095 = vsel %vm794, %v1071, %v1094
        %v1096 = vsel %vm796, %v1080, %v1095
        %1097 = vrot.lane.b32.xlu0 %v1096, 104
        %v1098 = vpop.permute.xlu0 %1097
        %v1099 = vsel %vm701, %v1098, 0
        %1101 = vmatprep.subr.mxu0 0.0
        %1102 = vmatpush1.msra.mxu0 %v1081
        %1103 = vmatprep.subr.mxu0 0.0
        %1104 = vmatpush1.msra.mxu0 0.0
        %1105 = vmatprep.subr.mxu0 0.0
        %1106 = vmatpush1.msra.mxu0 0.0
        %1107 = vmatprep.subr.mxu0 0.0
        %1108 = vmatpush1.msra.mxu0 0.0
        %1109 = vmatprep.subr.mxu0 0.0
        %1110 = vmatpush1.msra.mxu0 0.0
        %1111 = vmatprep.subr.mxu0 0.0
        %1112 = vmatpush1.msra.mxu0 0.0
        %1113 = vmatprep.subr.mxu0 0.0
        %1114 = vmatpush1.msra.mxu0 0.0
        %1115 = vmatprep.subr.mxu0 0.0
        %1116 = vmatpush1.msra.mxu0 0.0
        %1117 = vmatprep.subr.mxu0 0.0
        %1118 = vmatpush1.msra.mxu0 0.0
        %1119 = vmatprep.subr.mxu0 0.0
        %1120 = vmatpush1.msra.mxu0 0.0
        %1121 = vmatprep.subr.mxu0 0.0
        %1122 = vmatpush1.msra.mxu0 0.0
        %1123 = vmatprep.subr.mxu0 0.0
        %1124 = vmatpush1.msra.mxu0 0.0
        %1125 = vmatprep.subr.mxu0 0.0
        %1126 = vmatpush1.msra.mxu0 0.0
        %1127 = vmatprep.subr.mxu0 0.0
        %1128 = vmatpush1.msra.mxu0 0.0
        %1129 = vmatprep.subr.mxu0 0.0
        %1130 = vmatpush1.msra.mxu0 0.0
        %1131 = vmatprep.subr.mxu0 0.0
        %1132 = vmatpush1.msra.mxu0 0.0
        %1133 = vmatprep.subr.mxu0 0.0
        %1134 = vmatpush1.msra.mxu0 0.0
        %1135 = vmatprep.subr.mxu0 0.0
        %1136 = vmatpush1.msra.mxu0 0.0
        %1137 = vmatprep.subr.mxu0 0.0
        %1138 = vmatpush1.msra.mxu0 0.0
        %1139 = vmatprep.subr.mxu0 0.0
        %1140 = vmatpush1.msra.mxu0 0.0
        %1141 = vmatprep.subr.mxu0 0.0
        %1142 = vmatpush1.msra.mxu0 0.0
        %1143 = vmatprep.subr.mxu0 0.0
        %1144 = vmatpush1.msra.mxu0 0.0
        %1145 = vmatprep.subr.mxu0 0.0
        %1146 = vmatpush1.msra.mxu0 0.0
        %1147 = vmatprep.subr.mxu0 0.0
        %1148 = vmatpush1.msra.mxu0 0.0
        %1149 = vmatprep.subr.mxu0 0.0
        %1150 = vmatpush1.msra.mxu0 0.0
        %1151 = vmatprep.subr.mxu0 0.0
        %1152 = vmatpush1.msra.mxu0 0.0
        %1153 = vmatprep.subr.mxu0 0.0
        %1154 = vmatpush1.msra.mxu0 0.0
        %1155 = vmatprep.subr.mxu0 0.0
        %1156 = vmatpush1.msra.mxu0 0.0
        %1157 = vmatprep.subr.mxu0 0.0
        %1158 = vmatpush1.msra.mxu0 0.0
        %1159 = vmatprep.subr.mxu0 0.0
        %1160 = vmatpush1.msra.mxu0 0.0
        %1161 = vmatprep.subr.mxu0 0.0
        %1162 = vmatpush1.msra.mxu0 0.0
        %1163 = vmatprep.subr.mxu0 0.0
        %1164 = vmatpush1.msra.mxu0 0.0
        %1165 = vmatprep.mubr.f32.mxu0 0.0
        %1166 = vmatmul.mubr.f32.gmra.mrb[0].mxu0 %v1099
        %v1167 = vpop.f32.mrb[0].mxu0
        %v1168 = vadd.f32 0.0, %v1167
        %v1169 = vpop.f32.mrb[0].mxu0
        %1170 = vdwg.mxu0
        %v1171 = vadd.f32 %v876, %v1168
        %vm1172 = vcmask 1043456
        %v1173 = vrot.slane %v407, 4
        %v1174 = vrot.slane %v410, 4
        %v1175 = vsel %vm1172, %v1173, %v1174
        %v1176 = vrot.slane %v415, 4
        %v1177 = vrot.slane %v418, 4
        %v1178 = vsel %vm1172, %v1176, %v1177
        %v1179 = vrot.slane %v423, 4
        %v1180 = vrot.slane %v426, 4
        %v1181 = vsel %vm1172, %v1179, %v1180
        %v1182 = vrot.slane %v431, 4
        %v1183 = vrot.slane %v434, 4
        %v1184 = vsel %vm1172, %v1182, %v1183
        %v1185 = vrot.slane %v439, 4
        %v1186 = vrot.slane %v442, 4
        %v1187 = vsel %vm1172, %v1185, %v1186
        %v1188 = vrot.slane %v447, 4
        %v1189 = vrot.slane %v450, 4
        %v1190 = vsel %vm1172, %v1188, %v1189
        %v1191 = vrot.slane %v455, 4
        %v1192 = vrot.slane %v458, 4
        %v1193 = vsel %vm1172, %v1191, %v1192
        %v1194 = vrot.slane %v463, 4
        %v1195 = vrot.slane %v466, 4
        %v1196 = vsel %vm1172, %v1194, %v1195
        %1197 = vrot.lane.b32.xlu0 %v1175, 96
        %v1198 = vpop.permute.xlu0 %1197
        %1199 = vrot.lane.b32.xlu0 %v1174, 96
        %v1200 = vpop.permute.xlu0 %1199
        %1201 = vrot.lane.b32.xlu0 %v1178, 96
        %v1202 = vpop.permute.xlu0 %1201
        %1203 = vrot.lane.b32.xlu0 %v1177, 96
        %v1204 = vpop.permute.xlu0 %1203
        %1205 = vrot.lane.b32.xlu0 %v1181, 96
        %v1206 = vpop.permute.xlu0 %1205
        %1207 = vrot.lane.b32.xlu0 %v1180, 96
        %v1208 = vpop.permute.xlu0 %1207
        %1209 = vrot.lane.b32.xlu0 %v1184, 96
        %v1210 = vpop.permute.xlu0 %1209
        %1211 = vrot.lane.b32.xlu0 %v1183, 96
        %v1212 = vpop.permute.xlu0 %1211
        %1213 = vrot.lane.b32.xlu0 %v1187, 96
        %v1214 = vpop.permute.xlu0 %1213
        %1215 = vrot.lane.b32.xlu0 %v1186, 96
        %v1216 = vpop.permute.xlu0 %1215
        %1217 = vrot.lane.b32.xlu0 %v1190, 96
        %v1218 = vpop.permute.xlu0 %1217
        %1219 = vrot.lane.b32.xlu0 %v1189, 96
        %v1220 = vpop.permute.xlu0 %1219
        %1221 = vrot.lane.b32.xlu0 %v1193, 96
        %v1222 = vpop.permute.xlu0 %1221
        %1223 = vrot.lane.b32.xlu0 %v1192, 96
        %v1224 = vpop.permute.xlu0 %1223
        %1225 = vrot.lane.b32.xlu0 %v1196, 96
        %v1226 = vpop.permute.xlu0 %1225
        %1227 = vrot.lane.b32.xlu0 %v1195, 96
        %v1228 = vpop.permute.xlu0 %1227
        %v1245 = vadd.f32 %v950, %v1198
        %v1246 = vadd.f32 %v951, %v1200
        %v1247 = vadd.f32 %v952, %v1202
        %v1248 = vadd.f32 %v953, %v1204
        %v1249 = vadd.f32 %v954, %v1206
        %v1250 = vadd.f32 %v955, %v1208
        %v1251 = vadd.f32 %v956, %v1210
        %v1252 = vadd.f32 %v957, %v1212
        %v1253 = vadd.f32 %v958, %v1214
        %v1254 = vadd.f32 %v959, %v1216
        %v1255 = vadd.f32 %v960, %v1218
        %v1256 = vadd.f32 %v961, %v1220
        %v1257 = vadd.f32 %v962, %v1222
        %v1258 = vadd.f32 %v963, %v1224
        %v1259 = vadd.f32 %v964, %v1226
        %v1260 = vadd.f32 %v965, %v1228
        %v1261 = vld [vmem:[%s2 + $0x2] sm:$0x1]
        %v1262 = vlaneseq
        %v1263 = vshrl.u32 %v1262, 7
        %v1264 = vsub.s32 0, %v1263
        %v1265 = vrot.slane %v1261, %v1264
        %1267 = vrot.lane.b32.xlu0 %v1265, 56
        %v1268 = vpop.permute.xlu0 %1267
        %v1270 = vadd.f32 %v1245, %v1268
        %v1271 = vadd.f32 %v1246, %v1268
        %v1272 = vadd.f32 %v1247, %v1268
        %v1273 = vadd.f32 %v1248, %v1268
        %v1274 = vadd.f32 %v1249, %v1268
        %v1275 = vadd.f32 %v1250, %v1268
        %v1276 = vadd.f32 %v1251, %v1268
        %v1277 = vadd.f32 %v1252, %v1268
        %v1278 = vadd.f32 %v1253, %v1268
        %v1279 = vadd.f32 %v1254, %v1268
        %v1280 = vadd.f32 %v1255, %v1268
        %v1281 = vadd.f32 %v1256, %v1268
        %v1282 = vadd.f32 %v1257, %v1268
        %v1283 = vadd.f32 %v1258, %v1268
        %v1284 = vadd.f32 %v1259, %v1268
        %v1285 = vadd.f32 %v1260, %v1268
        %v1286 = vmax.f32 %v1270, 0.0
        %v1287 = vmax.f32 %v1271, 0.0
        %v1288 = vmax.f32 %v1272, 0.0
        %v1289 = vmax.f32 %v1273, 0.0
        %v1290 = vmax.f32 %v1274, 0.0
        %v1291 = vmax.f32 %v1275, 0.0
        %v1292 = vmax.f32 %v1276, 0.0
        %v1293 = vmax.f32 %v1277, 0.0
        %v1294 = vmax.f32 %v1278, 0.0
        %v1295 = vmax.f32 %v1279, 0.0
        %v1296 = vmax.f32 %v1280, 0.0
        %v1297 = vmax.f32 %v1281, 0.0
        %v1298 = vmax.f32 %v1282, 0.0
        %v1299 = vmax.f32 %v1283, 0.0
        %v1300 = vmax.f32 %v1284, 0.0
        %v1301 = vmax.f32 %v1285, 0.0
        %vm1302 = vcmask 523712
        %v1303 = vsel %vm1302, %v1286, -inf
        %vm1304 = vcmask 519616
        %v1305 = vsel %vm1304, %v1287, -inf
        %v1306 = vmax.f32 %v1303, %v1305
        %v1307 = vrot.slane %v1306, 4
        %v1308 = vmax.f32 %v1306, %v1307
        %v1309 = vrot.slane %v1308, 2
        %v1310 = vmax.f32 %v1308, %v1309
        %v1311 = vrot.slane %v1310, 1
        %v1312 = vmax.f32 %v1310, %v1311
        %v1313 = vsel %vm1302, %v1288, -inf
        %v1314 = vsel %vm1304, %v1289, -inf
        %v1315 = vmax.f32 %v1313, %v1314
        %v1316 = vrot.slane %v1315, 4
        %v1317 = vmax.f32 %v1315, %v1316
        %v1318 = vrot.slane %v1317, 2
        %v1319 = vmax.f32 %v1317, %v1318
        %v1320 = vrot.slane %v1319, 1
        %v1321 = vmax.f32 %v1319, %v1320
        %v1322 = vsel %vm1302, %v1290, -inf
        %v1323 = vsel %vm1304, %v1291, -inf
        %v1324 = vmax.f32 %v1322, %v1323
        %v1325 = vrot.slane %v1324, 4
        %v1326 = vmax.f32 %v1324, %v1325
        %v1327 = vrot.slane %v1326, 2
        %v1328 = vmax.f32 %v1326, %v1327
        %v1329 = vrot.slane %v1328, 1
        %v1330 = vmax.f32 %v1328, %v1329
        %v1331 = vsel %vm1302, %v1292, -inf
        %v1332 = vsel %vm1304, %v1293, -inf
        %v1333 = vmax.f32 %v1331, %v1332
        %v1334 = vrot.slane %v1333, 4
        %v1335 = vmax.f32 %v1333, %v1334
        %v1336 = vrot.slane %v1335, 2
        %v1337 = vmax.f32 %v1335, %v1336
        %v1338 = vrot.slane %v1337, 1
        %v1339 = vmax.f32 %v1337, %v1338
        %v1340 = vsel %vm1302, %v1294, -inf
        %v1341 = vsel %vm1304, %v1295, -inf
        %v1342 = vmax.f32 %v1340, %v1341
        %v1343 = vrot.slane %v1342, 4
        %v1344 = vmax.f32 %v1342, %v1343
        %v1345 = vrot.slane %v1344, 2
        %v1346 = vmax.f32 %v1344, %v1345
        %v1347 = vrot.slane %v1346, 1
        %v1348 = vmax.f32 %v1346, %v1347
        %v1349 = vsel %vm1302, %v1296, -inf
        %v1350 = vsel %vm1304, %v1297, -inf
        %v1351 = vmax.f32 %v1349, %v1350
        %v1352 = vrot.slane %v1351, 4
        %v1353 = vmax.f32 %v1351, %v1352
        %v1354 = vrot.slane %v1353, 2
        %v1355 = vmax.f32 %v1353, %v1354
        %v1356 = vrot.slane %v1355, 1
        %v1357 = vmax.f32 %v1355, %v1356
        %v1358 = vsel %vm1302, %v1298, -inf
        %v1359 = vsel %vm1304, %v1299, -inf
        %v1360 = vmax.f32 %v1358, %v1359
        %v1361 = vrot.slane %v1360, 4
        %v1362 = vmax.f32 %v1360, %v1361
        %v1363 = vrot.slane %v1362, 2
        %v1364 = vmax.f32 %v1362, %v1363
        %v1365 = vrot.slane %v1364, 1
        %v1366 = vmax.f32 %v1364, %v1365
        %v1367 = vsel %vm1302, %v1300, -inf
        %v1368 = vsel %vm1304, %v1301, -inf
        %v1369 = vmax.f32 %v1367, %v1368
        %v1370 = vrot.slane %v1369, 4
        %v1371 = vmax.f32 %v1369, %v1370
        %v1372 = vrot.slane %v1371, 2
        %v1373 = vmax.f32 %v1371, %v1372
        %v1374 = vrot.slane %v1373, 1
        %v1375 = vmax.f32 %v1373, %v1374
        %v1376 = vld [vmem:[#allocation7 + $0x10] sm:$0xff]
        %v1385 = vsel %vm784, %v1321, %v1312
        %v1386 = vsel %vm786, %v1330, %v1385
        %v1387 = vsel %vm788, %v1339, %v1386
        %v1388 = vsel %vm790, %v1348, %v1387
        %v1389 = vsel %vm792, %v1357, %v1388
        %v1390 = vsel %vm794, %v1366, %v1389
        %v1391 = vsel %vm796, %v1375, %v1390
        %1392 = vrot.lane.b32.xlu0 %v1391, 72
        %v1393 = vpop.permute.xlu0 %1392
        %v1394 = vsel %vm701, %v1393, 0
        %1396 = vmatprep.subr.mxu0 0.0
        %1397 = vmatpush1.msra.mxu0 %v1376
        %1398 = vmatprep.subr.mxu0 0.0
        %1399 = vmatpush1.msra.mxu0 0.0
        %1400 = vmatprep.subr.mxu0 0.0
        %1401 = vmatpush1.msra.mxu0 0.0
        %1402 = vmatprep.subr.mxu0 0.0
        %1403 = vmatpush1.msra.mxu0 0.0
        %1404 = vmatprep.subr.mxu0 0.0
        %1405 = vmatpush1.msra.mxu0 0.0
        %1406 = vmatprep.subr.mxu0 0.0
        %1407 = vmatpush1.msra.mxu0 0.0
        %1408 = vmatprep.subr.mxu0 0.0
        %1409 = vmatpush1.msra.mxu0 0.0
        %1410 = vmatprep.subr.mxu0 0.0
        %1411 = vmatpush1.msra.mxu0 0.0
        %1412 = vmatprep.subr.mxu0 0.0
        %1413 = vmatpush1.msra.mxu0 0.0
        %1414 = vmatprep.subr.mxu0 0.0
        %1415 = vmatpush1.msra.mxu0 0.0
        %1416 = vmatprep.subr.mxu0 0.0
        %1417 = vmatpush1.msra.mxu0 0.0
        %1418 = vmatprep.subr.mxu0 0.0
        %1419 = vmatpush1.msra.mxu0 0.0
        %1420 = vmatprep.subr.mxu0 0.0
        %1421 = vmatpush1.msra.mxu0 0.0
        %1422 = vmatprep.subr.mxu0 0.0
        %1423 = vmatpush1.msra.mxu0 0.0
        %1424 = vmatprep.subr.mxu0 0.0
        %1425 = vmatpush1.msra.mxu0 0.0
        %1426 = vmatprep.subr.mxu0 0.0
        %1427 = vmatpush1.msra.mxu0 0.0
        %1428 = vmatprep.subr.mxu0 0.0
        %1429 = vmatpush1.msra.mxu0 0.0
        %1430 = vmatprep.subr.mxu0 0.0
        %1431 = vmatpush1.msra.mxu0 0.0
        %1432 = vmatprep.subr.mxu0 0.0
        %1433 = vmatpush1.msra.mxu0 0.0
        %1434 = vmatprep.subr.mxu0 0.0
        %1435 = vmatpush1.msra.mxu0 0.0
        %1436 = vmatprep.subr.mxu0 0.0
        %1437 = vmatpush1.msra.mxu0 0.0
        %1438 = vmatprep.subr.mxu0 0.0
        %1439 = vmatpush1.msra.mxu0 0.0
        %1440 = vmatprep.subr.mxu0 0.0
        %1441 = vmatpush1.msra.mxu0 0.0
        %1442 = vmatprep.subr.mxu0 0.0
        %1443 = vmatpush1.msra.mxu0 0.0
        %1444 = vmatprep.subr.mxu0 0.0
        %1445 = vmatpush1.msra.mxu0 0.0
        %1446 = vmatprep.subr.mxu0 0.0
        %1447 = vmatpush1.msra.mxu0 0.0
        %1448 = vmatprep.subr.mxu0 0.0
        %1449 = vmatpush1.msra.mxu0 0.0
        %1450 = vmatprep.subr.mxu0 0.0
        %1451 = vmatpush1.msra.mxu0 0.0
        %1452 = vmatprep.subr.mxu0 0.0
        %1453 = vmatpush1.msra.mxu0 0.0
        %1454 = vmatprep.subr.mxu0 0.0
        %1455 = vmatpush1.msra.mxu0 0.0
        %1456 = vmatprep.subr.mxu0 0.0
        %1457 = vmatpush1.msra.mxu0 0.0
        %1458 = vmatprep.subr.mxu0 0.0
        %1459 = vmatpush1.msra.mxu0 0.0
        %1460 = vmatprep.mubr.f32.mxu0 0.0
        %1461 = vmatmul.mubr.f32.gmra.mrb[0].mxu0 %v1394
        %v1462 = vpop.f32.mrb[0].mxu0
        %v1463 = vadd.f32 0.0, %v1462
        %v1464 = vpop.f32.mrb[0].mxu0
        %1465 = vdwg.mxu0
        %v1466 = vadd.f32 %v1171, %v1463
        %1467 = vst [vmem:[%s272] sm:$0xff] %v1466
        %s1468 = sand.u32 %s141, 1
        %s1469 = scalar_lea.sflag [#allocation4], %s1468
        %s1470 = sand.u32 %s141, 1
        %s1471 = smul.addr %s1470, 8
        %s1472 = scalar_lea.vmem [#allocation8], %s1471
        // Predicated region
        $region53: #{tpu_custom_call.1} parent=39 // pred_check
          %p1473 = pneg %p151
        $region54: #{tpu_custom_call.1} parent=39 // pred_check_branch
          %1475 = sbr.rel (%p1473) target = $region56
        $region55: #{tpu_custom_call.1} parent=39 // pred_region
          %s1477 = ssub.s32 128, 128
          %1478 = vsyncadd %s1469, %s1477
          %s1479 = smul.addr %s23, 128
          %s1480 = scalar_lea.hbm %s5, %s1479
          %s1482 = sshll.u32 %s1472, 4
          %s1483 = int_to_ptr.vmem [resolvable:$true] %s1482
          %1485 = dma.vmem_to_hbm [thread:$0]  %s1483, 128, %s1480, %s1469
        $region56: #{tpu_custom_call.1} parent=39 // pred_fallthru
          _
      $region40: #{tpu_custom_call.1} parent=5 // pred_fallthru
        _
      %p1486 = scmp.le.s32.totalorder 2, %s18
      // Predicated region
      $region57: #{tpu_custom_call.1} parent=5 // pred_check
        %p1487 = pneg %p1486
      $region58: #{tpu_custom_call.1} parent=5 // pred_check_branch
        %1489 = sbr.rel (%p1487) target = $region60
      $region59: #{tpu_custom_call.1} parent=5 // pred_region
        %s1490 = ssub.s32 %s18, 2
        // Predicated region
        $region61: #{tpu_custom_call.1} parent=59 // pred_check
          %p1491 = pneg %p157
        $region62: #{tpu_custom_call.1} parent=59 // pred_check_branch
          %1493 = sbr.rel (%p1491) target = $region64
        $region63: #{tpu_custom_call.1} parent=59 // pred_region
          %s1494 = sand.u32 %s142, 1
          %s1495 = scalar_lea.sflag [#allocation4], %s1494
          %s1496 = sand.u32 %s142, 1
          %s1497 = smul.addr %s1496, 8
          %s1498 = scalar_lea.vmem [#allocation8], %s1497
          %1499 = dma.done %s1495, 128
        $region64: #{tpu_custom_call.1} parent=59 // pred_fallthru
          _
      $region60: #{tpu_custom_call.1} parent=5 // pred_fallthru
        _
    $region6: #{tpu_custom_call.1} parent=1 // loop_footer
      %s22 = sadd.s32 1, %s18
    $region7: #{tpu_custom_call.1} parent=1 // loop_footer_branch
      %17 = sbr.rel target = $region3
    $region8: #{tpu_custom_call.1} parent=1 // loop_exit
      _
    %1500 = vsyncpa [#allocation3], 1
    %s1501 = scalar_lea.sflag [#allocation3], 1
    %1502 = vsyncpa %s1501, 1
    %1503 = vsyncpa [#allocation6], 1
    %1504 = vsyncpa [#allocation4], 1
    %s1505 = scalar_lea.sflag [#allocation4], 1
    %1506 = vsyncpa %s1505, 1

</llo_original>
